<compile_context>
chip_gen: v7x
topology: tpu7x:2x2x1
jax: 0.10.0
libtpu: 0.0.40
codegen_flags: <defaults>
</compile_context>

<pallas_src>
import functools

import jax
import jax.numpy as jnp
from jax.experimental import pallas as pl
from jax.experimental.pallas import tpu as pltpu

BN_EPS = 1e-5


def _round_up(x, m):
    return (x + m - 1) // m * m


def _vmem_limits():
    """Returns (compiler vmem_limit_bytes, internal tile budget) in bytes."""
    cap = None
    try:
        cap = int(pltpu.get_tpu_info().vmem_capacity_bytes)
    except Exception:
        cap = None
    kind = ""
    try:
        kind = jax.devices()[0].device_kind.lower()
    except Exception:
        pass
    if cap is None:
        cap = 64 << 20                    # conservative fallback (v7x per-TC)
    if "v7" in kind:
        cap = min(cap, 64 << 20)          # guard against per-chip (2-TC) reports
    limit = min(cap * 3 // 4, 96 << 20)
    return limit, max(limit - (6 << 20), 16 << 20)


VMEM_LIMIT, VMEM_BUDGET = _vmem_limits()


def _tiled_bytes(rows, cols, itemsize):
    """VMEM bytes of a [rows, cols] tile including lane/sublane padding."""
    sub = 8 * (4 // itemsize)             # 8 rows f32, 16 rows bf16, 32 rows int8
    return _round_up(max(rows, 1), sub) * _round_up(max(cols, 1), 128) * itemsize


# ----------------------------------------------------------------------------
# Generic im2col-matmul kernel (K grid axis + f32 accumulator):
#   out = [relu]( (x @ w) + bias [+ residual] )
#   x: bf16 [tm, tk], w: bf16 [tk, tn] (BN scale folded), bias f32, res bf16
# ----------------------------------------------------------------------------
def _matmul_bn_kernel(x_ref, w_ref, b_ref, o_ref, acc_ref, *, apply_relu):
    @pl.when(pl.program_id(2) == 0)
    def _():
        acc_ref[...] = jnp.zeros_like(acc_ref)

    acc_ref[...] += jnp.dot(x_ref[...], w_ref[...],
                            preferred_element_type=jnp.float32)

    @pl.when(pl.program_id(2) == pl.num_programs(2) - 1)
    def _():
        out = acc_ref[...] + b_ref[...]
        if apply_relu:
            out = jnp.maximum(out, 0.0)
        o_ref[...] = out.astype(o_ref.dtype)


def _matmul_bn_res_kernel(x_ref, w_ref, b_ref, res_ref, o_ref, acc_ref, *,
                          apply_relu):
    @pl.when(pl.program_id(2) == 0)
    def _():
        acc_ref[...] = jnp.zeros_like(acc_ref)

    acc_ref[...] += jnp.dot(x_ref[...], w_ref[...],
                            preferred_element_type=jnp.float32)

    @pl.when(pl.program_id(2) == pl.num_programs(2) - 1)
    def _():
        out = acc_ref[...] + b_ref[...] + res_ref[...].astype(jnp.float32)
        if apply_relu:
            out = jnp.maximum(out, 0.0)
        o_ref[...] = out.astype(o_ref.dtype)


def _pick_matmul_tiles(M, K, Cp, has_res, out_itemsize):
    """(tm, tn, tk, Kp): M/N/K tiles and padded K, under the VMEM budget
    using tiled (lane/sublane padded) byte accounting."""
    budget = VMEM_BUDGET - (4 << 20)
    Mp8 = _round_up(max(M, 8), 8)

    tn = 128
    for c in (min(Cp, 512), 256, 128):    # 256-wide MXU friendly on v6e/v7x
        if c >= 128 and Cp % c == 0:
            tn = c
            break

    def fits(tm, tk):
        need = (2 * _tiled_bytes(tm, tk, 2)               # bf16 patch tiles
                + 2 * _tiled_bytes(tk, tn, 2)             # bf16 weight tiles
                + 2 * _tiled_bytes(1, tn, 4)              # f32 bias
                + (2 * _tiled_bytes(tm, tn, 2) if has_res else 0)
                + 2 * _tiled_bytes(tm, tn, out_itemsize)  # output tiles
                + _tiled_bytes(tm, tn, 4))                # f32 accumulator
        return need <= budget

    # Preferred: single K step (no K padding) with the largest M tile.
    tm = min(1024, Mp8)
    while tm > 8 and not fits(tm, K):
        tm = _round_up(tm // 2, 8)
    if fits(tm, K) and tm >= min(512, Mp8):
        return tm, tn, K, K

    # Large K: tile the contraction so tm can stay large (v7x 64 MiB VMEM).
    tm = min(1024, Mp8)
    tk = 2048
    while tk > 128 and (tk > _round_up(K, 128) or not fits(tm, tk)):
        tk //= 2
    while tm > 8 and not fits(tm, tk):
        tm = _round_up(tm // 2, 8)
    return tm, tn, tk, _round_up(K, tk)


def matmul_bn_pallas(x, w, bias, residual=None, *, apply_relu, out_dtype):
    """x: bf16 [M, K], w: bf16 [K, Cp] (BN scale folded), bias: f32 [1, Cp],
    residual: optional bf16 [M, Cp].  Returns out_dtype [M, Cp]."""
    M, K = x.shape
    Kw, Cp = w.shape
    assert Kw == K and Cp % 128 == 0
    has_res = residual is not None

    tm, tn, tk, Kp = _pick_matmul_tiles(M, K, Cp, has_res,
                                        jnp.dtype(out_dtype).itemsize)
    if Kp != K:
        x = jnp.pad(x, ((0, 0), (0, Kp - K)))
        w = jnp.pad(w, ((0, Kp - K), (0, 0)))
    # M is padded only to the sublane quantum; a ragged last M tile is handled
    # by Pallas boundary masking (no pad-to-tm pass over HBM).
    Mp = _round_up(M, 8)
    if Mp != M:
        x = jnp.pad(x, ((0, Mp - M), (0, 0)))
        if has_res:
            residual = jnp.pad(residual, ((0, Mp - M), (0, 0)))

    in_specs = [
        pl.BlockSpec((tm, tk), lambda i, j, k: (i, k)),   # patches
        pl.BlockSpec((tk, tn), lambda i, j, k: (k, j)),   # weights
        pl.BlockSpec((1, tn), lambda i, j, k: (0, j)),    # bias
    ]
    args = [x, w, bias]
    if has_res:
        in_specs.append(pl.BlockSpec((tm, tn), lambda i, j, k: (i, j)))
        args.append(residual)
        kernel = functools.partial(_matmul_bn_res_kernel, apply_relu=apply_relu)
    else:
        kernel = functools.partial(_matmul_bn_kernel, apply_relu=apply_relu)

    out = pl.pallas_call(
        kernel,
        out_shape=jax.ShapeDtypeStruct((Mp, Cp), out_dtype),
        grid_spec=pltpu.PrefetchScalarGridSpec(
            num_scalar_prefetch=0,
            grid=(pl.cdiv(Mp, tm), Cp // tn, Kp // tk),
            in_specs=in_specs,
            out_specs=pl.BlockSpec((tm, tn), lambda i, j, k: (i, j)),
            scratch_shapes=[pltpu.VMEM((tm, tn), jnp.float32)],
        ),
        compiler_params=pltpu.CompilerParams(
            dimension_semantics=("parallel", "parallel", "arbitrary"),
            vmem_limit_bytes=VMEM_LIMIT,
        ),
    )(*args)
    return out[:M] if Mp != M else out


# ----------------------------------------------------------------------------
# Fused stride-1 3x3 conv with in-kernel im2col (9 shifted dots, f32 accum):
#   out = [relu]( conv3x3(x) * bn_scale + bn_bias [+ residual] )
# ----------------------------------------------------------------------------
def _conv3x3_s1_kernel(x_ref, w_ref, b_ref, o_ref, *, H, W, Cin, apply_relu):
    acc = None
    for dy in range(3):
        for dx in range(3):
            lhs = x_ref[0, dy:dy + H, dx:dx + W, :].reshape(H * W, Cin)
            tap = dy * 3 + dx
            rhs = w_ref[tap * Cin:(tap + 1) * Cin, :]
            d = jnp.dot(lhs, rhs, preferred_element_type=jnp.float32)
            acc = d if acc is None else acc + d
    out = acc + b_ref[...]
    if apply_relu:
        out = jnp.maximum(out, 0.0)
    o_ref[0] = out.astype(o_ref.dtype)


def _conv3x3_s1_res_kernel(x_ref, w_ref, b_ref, res_ref, o_ref, *, H, W, Cin,
                           apply_relu):
    acc = None
    for dy in range(3):
        for dx in range(3):
            lhs = x_ref[0, dy:dy + H, dx:dx + W, :].reshape(H * W, Cin)
            tap = dy * 3 + dx
            rhs = w_ref[tap * Cin:(tap + 1) * Cin, :]
            d = jnp.dot(lhs, rhs, preferred_element_type=jnp.float32)
            acc = d if acc is None else acc + d
    out = acc + b_ref[...] + res_ref[0].astype(jnp.float32)
    if apply_relu:
        out = jnp.maximum(out, 0.0)
    o_ref[0] = out.astype(o_ref.dtype)


def _pick_conv_tn(Hp, Wp, Cin, M_img, Cp, has_res, out_itemsize):
    budget = VMEM_BUDGET - (4 << 20)
    K = 9 * Cin
    for tn in (min(Cp, 512), 256, 128):
        if tn < 128 or Cp % tn != 0:
            continue
        need = (2 * Hp * _round_up(Wp, 16) * _round_up(Cin, 128) * 2  # image
                + 2 * _tiled_bytes(K, tn, 2)                          # weights
                + 2 * _tiled_bytes(1, tn, 4)                          # bias
                + (2 * _tiled_bytes(M_img, tn, 2) if has_res else 0)  # residual
                + 2 * _tiled_bytes(M_img, tn, out_itemsize)           # output
                + _tiled_bytes(M_img, tn, 4)                          # f32 acc
                + 3 * _tiled_bytes(M_img, Cin, 2))                    # tap slices
        if need <= budget:
            return tn
    return None


def _conv3x3_via_matmul(x_nhwc, w, bias, residual, apply_relu, out_dtype):
    N, H, W, _ = x_nhwc.shape
    Cp = w.shape[1]
    p, _ = im2col(x_nhwc, 3, 1, 1)
    res2d = residual.reshape(N * H * W, Cp) if residual is not None else None
    out = matmul_bn_pallas(p, w, bias, residual=res2d,
                           apply_relu=apply_relu, out_dtype=out_dtype)
    return out.reshape(N, H * W, Cp)


def conv3x3_bn_pallas(x_nhwc, w, bias, residual=None, *, apply_relu, out_dtype):
    """x_nhwc: bf16 [N, H, W, Cin]; w: bf16 [9*Cin, Cp] ordered (dy, dx, cin)
    with the BN scale folded in; bias: f32 [1, Cp]; residual: optional bf16
    [N, H*W, Cp].  Returns out_dtype [N, H*W, Cp]."""
    N, H, W, Cin = x_nhwc.shape
    K, Cp = w.shape
    assert K == 9 * Cin and Cp % 128 == 0
    M_img = H * W
    has_res = residual is not None

    tn = _pick_conv_tn(H + 2, W + 2, Cin, M_img, Cp, has_res,
                       jnp.dtype(out_dtype).itemsize)
    if tn is None:
        # TODO(synk): row-block halo tiling for images that do not fit VMEM.
        return _conv3x3_via_matmul(x_nhwc, w, bias, residual, apply_relu,
                                   out_dtype)

    xp = jnp.pad(x_nhwc, ((0, 0), (1, 1), (1, 1), (0, 0)))
    Hp, Wp = H + 2, W + 2

    in_specs = [
        pl.BlockSpec((1, Hp, Wp, Cin), lambda n, j: (n, 0, 0, 0)),  # image
        pl.BlockSpec((K, tn), lambda n, j: (0, j)),                 # weights
        pl.BlockSpec((1, tn), lambda n, j: (0, j)),                 # bias
    ]
    args = [xp, w, bias]
    if has_res:
        in_specs.append(pl.BlockSpec((1, M_img, tn), lambda n, j: (n, 0, j)))
        args.append(residual)
        kernel = functools.partial(_conv3x3_s1_res_kernel, H=H, W=W, Cin=Cin,
                                   apply_relu=apply_relu)
    else:
        kernel = functools.partial(_conv3x3_s1_kernel, H=H, W=W, Cin=Cin,
                                   apply_relu=apply_relu)

    call = pl.pallas_call(
        kernel,
        out_shape=jax.ShapeDtypeStruct((N, M_img, Cp), out_dtype),
        grid_spec=pltpu.PrefetchScalarGridSpec(
            num_scalar_prefetch=0,
            grid=(N, Cp // tn),
            in_specs=in_specs,
            out_specs=pl.BlockSpec((1, M_img, tn), lambda n, j: (n, 0, j)),
        ),
        compiler_params=pltpu.CompilerParams(
            dimension_semantics=("parallel", "parallel"),
            vmem_limit_bytes=VMEM_LIMIT,
        ),
    )
    try:
        return jax.block_until_ready(call(*args))
    except Exception:
        # Compatibility guard (eager use): if the in-kernel im2col fails to
        # lower on some TPU generation / compiler, degrade to im2col-matmul.
        return _conv3x3_via_matmul(x_nhwc, w, bias, residual, apply_relu,
                                   out_dtype)


# ----------------------------------------------------------------------------
# Glue: wrapper-side im2col (strided conv only), BN folding, parameter setup
# ----------------------------------------------------------------------------
def im2col(x_nhwc, ksize, stride, pad):
    """Returns patches [N*Ho*Wo, ksize*ksize*C] ordered (dy, dx, cin)."""
    N, H, W, C = x_nhwc.shape
    xp = jnp.pad(x_nhwc, ((0, 0), (pad, pad), (pad, pad), (0, 0)))
    Ho = (H + 2 * pad - ksize) // stride + 1
    Wo = (W + 2 * pad - ksize) // stride + 1
    cols = []
    for dy in range(ksize):
        for dx in range(ksize):
            cols.append(xp[:, dy:dy + stride * Ho:stride,
                           dx:dx + stride * Wo:stride, :])
    patches = jnp.concatenate(cols, axis=-1)
    return patches.reshape(N * Ho * Wo, ksize * ksize * C), (N, Ho, Wo)


def prepare_conv_params(w_oihw, bn_params, cout_pad):
    """PyTorch [Cout, Cin, kh, kw] + BN stats -> bf16 [kh*kw*Cin, Cout_pad]
    with the BN scale folded into the weights, plus f32 [1, Cout_pad] bias.
    Note: folding gamma/sqrt(var+eps) into bf16 weights assumes the running
    variance is not pathologically small."""
    gamma, beta, mean, var = bn_params
    scale = gamma / jnp.sqrt(var + BN_EPS)
    bias = beta - mean * scale
    cout = w_oihw.shape[0]
    w_mat = jnp.transpose(w_oihw, (2, 3, 1, 0)).reshape(-1, cout)
    w_mat = w_mat * scale[None, :]
    if cout_pad > cout:
        w_mat = jnp.pad(w_mat, ((0, 0), (0, cout_pad - cout)))
        bias = jnp.pad(bias, (0, cout_pad - cout))
    return w_mat.astype(jnp.bfloat16), bias.reshape(1, -1).astype(jnp.float32)


def init_params(key, in_channels, out_channels, stride):
    ks = jax.random.split(key, 16)

    def conv_w(k, cout, cin, kh, kw):
        fan_in = cin * kh * kw
        bound = 1.0 / jnp.sqrt(fan_in)
        return jax.random.uniform(k, (cout, cin, kh, kw), jnp.float32,
                                  -bound, bound)

    def bn(k0, k1, k2, k3, c):
        gamma = jax.random.uniform(k0, (c,), jnp.float32, 0.5, 1.5)
        beta = 0.1 * jax.random.normal(k1, (c,), jnp.float32)
        mean = 0.1 * jax.random.normal(k2, (c,), jnp.float32)
        var = jax.random.uniform(k3, (c,), jnp.float32, 0.5, 1.5)
        return (gamma, beta, mean, var)

    params = {
        "w1": conv_w(ks[0], out_channels, in_channels, 3, 3),
        "bn1": bn(ks[1], ks[2], ks[3], ks[4], out_channels),
        "w2": conv_w(ks[5], out_channels, out_channels, 3, 3),
        "bn2": bn(ks[6], ks[7], ks[8], ks[9], out_channels),
    }
    if stride != 1 or in_channels != out_channels:
        params["ws"] = conv_w(ks[10], out_channels, in_channels, 1, 1)
        params["bns"] = bn(ks[11], ks[12], ks[13], ks[14], out_channels)
    return params


# ----------------------------------------------------------------------------
# ResidualBlock forward
# ----------------------------------------------------------------------------
def residual_block_forward(x_nchw, params, stride):
    x = jnp.transpose(x_nchw, (0, 2, 3, 1)).astype(jnp.bfloat16)  # NHWC bf16
    N, H, W, Cin = x.shape
    Cout = params["w1"].shape[0]
    Cp = _round_up(Cout, 128)             # lane-dense output channels
    Ho = (H + 2 - 3) // stride + 1
    Wo = (W + 2 - 3) // stride + 1
    M = N * Ho * Wo
    M_img = Ho * Wo

    w1, b1 = prepare_conv_params(params["w1"], params["bn1"], Cp)
    w2, b2 = prepare_conv_params(params["w2"], params["bn2"], Cp)

    # conv1(3x3, stride, pad 1) + bn1 + relu -> bf16
    if stride == 1:
        out1 = conv3x3_bn_pallas(x, w1, b1, residual=None, apply_relu=True,
                                 out_dtype=jnp.bfloat16)          # [N,M_img,Cp]
        out1_img = out1[:, :, :Cout].reshape(N, Ho, Wo, Cout)
    else:
        # TODO(synk): strided 3x3 conv still materializes im2col patches.
        p1, _ = im2col(x, 3, stride, 1)
        out1 = matmul_bn_pallas(p1, w1, b1, residual=None, apply_relu=True,
                                out_dtype=jnp.bfloat16)           # [M, Cp]
        out1_img = out1[:, :Cout].reshape(N, Ho, Wo, Cout)

    # shortcut -> bf16 residual [N, M_img, Cp] (fed straight into conv2)
    if stride != 1 or Cin != Cout:
        xs = x[:, ::stride, ::stride, :].reshape(M, Cin)
        ws, bs = prepare_conv_params(params["ws"], params["bns"], Cp)
        sc = matmul_bn_pallas(xs, ws, bs, residual=None, apply_relu=False,
                              out_dtype=jnp.bfloat16)             # [M, Cp]
    else:
        sc = x.reshape(M, Cin)
        if Cp > Cout:
            sc = jnp.pad(sc, ((0, 0), (0, Cp - Cout)))
    shortcut = sc.reshape(N, M_img, Cp)

    # conv2(3x3, s1, pad 1) + bn2 + residual add + relu, fused, in-kernel im2col
    out2 = conv3x3_bn_pallas(out1_img, w2, b2, residual=shortcut,
                             apply_relu=True, out_dtype=jnp.float32)

    y = out2[:, :, :Cout].reshape(N, Ho, Wo, Cout)
    return jnp.transpose(y, (0, 3, 1, 2))                          # NCHW


# ----------------------------------------------------------------------------
# Pure-JAX f32 reference (lax.conv) for the correctness check
# ----------------------------------------------------------------------------
def reference_forward(x_nchw, params, stride):
    def conv(x_nhwc, w_oihw, s, pad):
        return jax.lax.conv_general_dilated(
            x_nhwc, jnp.transpose(w_oihw, (2, 3, 1, 0)),
            window_strides=(s, s), padding=[(pad, pad), (pad, pad)],
            dimension_numbers=("NHWC", "HWIO", "NHWC"))

    def bn(xx, p):
        g, b, m, v = p
        return (xx - m) / jnp.sqrt(v + BN_EPS) * g + b

    x = jnp.transpose(x_nchw, (0, 2, 3, 1)).astype(jnp.float32)
    Cin = x.shape[-1]
    Cout = params["w1"].shape[0]
    out = jax.nn.relu(bn(conv(x, params["w1"], stride, 1), params["bn1"]))
    out = bn(conv(out, params["w2"], 1, 1), params["bn2"])
    if stride != 1 or Cin != Cout:
        sc = bn(conv(x, params["ws"], stride, 0), params["bns"])
    else:
        sc = x
    out = jax.nn.relu(out + sc)
    return jnp.transpose(out, (0, 3, 1, 2))


if __name__ == "__main__":
    base_key = jax.random.PRNGKey(0)

    def run_case(case_id, in_ch, out_ch, stride, N=2, H=16, W=16):
        k_x, k_p = jax.random.split(jax.random.fold_in(base_key, case_id))
        x = jax.random.normal(k_x, (N, in_ch, H, W), jnp.float32)
        params = init_params(k_p, in_ch, out_ch, stride)
        out = jax.block_until_ready(residual_block_forward(x, params, stride))
        ref = jax.block_until_ready(reference_forward(x, params, stride))
        assert out.shape == (N, out_ch, H // stride, W // stride), out.shape
        # bf16 matmul operands / bf16 intermediates with f32 accumulation.
        assert jnp.allclose(out, ref, atol=1e-1, rtol=5e-2), (
            case_id, float(jnp.max(jnp.abs(out - ref))))

    run_case(0, 4, 8, 2)   # downsampling block: strided conv1 + 1x1 conv shortcut
    run_case(1, 8, 8, 1)   # identity-shortcut block: fully in-kernel im2col path
    print("KERNEL_OK")
</pallas_src>

<mosaic_0001>
module attributes {stable_mosaic.version = 11 : i64} {
  func.func @_matmul_bn_kernel(%arg0: i32, %arg1: i32, %arg2: i32, %arg3: memref<128x36xbf16, #tpu.memory_space<vmem>>, %arg4: memref<36x128xbf16, #tpu.memory_space<vmem>>, %arg5: memref<1x128xf32, #tpu.memory_space<vmem>>, %arg6: memref<128x128xbf16, #tpu.memory_space<vmem>>, %arg7: memref<128x128xf32, #tpu.memory_space<vmem>>) attributes {dimension_semantics = [#tpu.dimension_semantics<parallel>, #tpu.dimension_semantics<parallel>, #tpu.dimension_semantics<arbitrary>], iteration_bounds = array<i64: 1, 1, 1>, scalar_prefetch = 0 : i64, scratch_operands = 1 : i64, tpu.core_type = #tpu.core_type<tc>, window_params = [{transform_indices = @transform_0, window_bounds = array<i64: 128, 36>}, {transform_indices = @transform_1, window_bounds = array<i64: 36, 128>}, {transform_indices = @transform_2, window_bounds = array<i64: 1, 128>}, {transform_indices = @transform_3, window_bounds = array<i64: 128, 128>}]} {
    %c0_i32 = arith.constant 0 : i32
    %0 = arith.cmpi eq, %arg2, %c0_i32 : i32
    %1 = arith.extui %0 : i1 to i32
    %c0_i32_0 = arith.constant 0 : i32
    %2 = arith.cmpi ne, %1, %c0_i32_0 : i32
    scf.if %2 {
      %cst_10 = arith.constant 0.000000e+00 : f32
      %12 = vector.broadcast %cst_10 : f32 to vector<128x128xf32>
      %c0_11 = arith.constant 0 : index
      %c0_12 = arith.constant 0 : index
      %13 = vector.load %arg7[%c0_11, %c0_12] : memref<128x128xf32, #tpu.memory_space<vmem>>, vector<128x128xf32>
      tpu.vector_store %arg7[%c0_11, %c0_12], %12 {strides = array<i32>} : memref<128x128xf32, #tpu.memory_space<vmem>>, vector<128x128xf32>,
    } else {
    }
    %c0 = arith.constant 0 : index
    %c0_1 = arith.constant 0 : index
    %3 = vector.load %arg7[%c0, %c0_1] : memref<128x128xf32, #tpu.memory_space<vmem>>, vector<128x128xf32>
    %c0_2 = arith.constant 0 : index
    %c0_3 = arith.constant 0 : index
    %4 = vector.load %arg3[%c0_2, %c0_3] : memref<128x36xbf16, #tpu.memory_space<vmem>>, vector<128x36xbf16>
    %c0_4 = arith.constant 0 : index
    %c0_5 = arith.constant 0 : index
    %5 = vector.load %arg4[%c0_4, %c0_5] : memref<36x128xbf16, #tpu.memory_space<vmem>>, vector<36x128xbf16>
    %cst = arith.constant dense<0.000000e+00> : vector<128x128xf32>
    %6 = tpu.matmul %4, %5, %cst {dimension_numbers = #tpu.dot_dimension_numbers<[1], [0], [0], [1], [0, 0, 1, 1], [], []>} : vector<128x36xbf16>, vector<36x128xbf16>, vector<128x128xf32> -> vector<128x128xf32>
    %7 = arith.addf %3, %6 : vector<128x128xf32>
    %c0_6 = arith.constant 0 : index
    %c0_7 = arith.constant 0 : index
    %8 = vector.load %arg7[%c0_6, %c0_7] : memref<128x128xf32, #tpu.memory_space<vmem>>, vector<128x128xf32>
    tpu.vector_store %arg7[%c0_6, %c0_7], %7 {strides = array<i32>} : memref<128x128xf32, #tpu.memory_space<vmem>>, vector<128x128xf32>,
    %c0_i32_8 = arith.constant 0 : i32
    %9 = arith.cmpi eq, %arg2, %c0_i32_8 : i32
    %10 = arith.extui %9 : i1 to i32
    %c0_i32_9 = arith.constant 0 : i32
    %11 = arith.cmpi ne, %10, %c0_i32_9 : i32
    scf.if %11 {
      %c0_10 = arith.constant 0 : index
      %c0_11 = arith.constant 0 : index
      %12 = vector.load %arg7[%c0_10, %c0_11] : memref<128x128xf32, #tpu.memory_space<vmem>>, vector<128x128xf32>
      %c0_12 = arith.constant 0 : index
      %c0_13 = arith.constant 0 : index
      %13 = vector.load %arg5[%c0_12, %c0_13] : memref<1x128xf32, #tpu.memory_space<vmem>>, vector<1x128xf32>
      %14 = vector.broadcast %13 : vector<1x128xf32> to vector<128x128xf32>
      %15 = arith.addf %12, %14 : vector<128x128xf32>
      %cst_14 = arith.constant 0.000000e+00 : f32
      %16 = vector.broadcast %cst_14 : f32 to vector<128x128xf32>
      %17 = arith.maximumf %15, %16 : vector<128x128xf32>
      %18 = arith.truncf %17 : vector<128x128xf32> to vector<128x128xbf16>
      %c0_15 = arith.constant 0 : index
      %c0_16 = arith.constant 0 : index
      %19 = vector.load %arg6[%c0_15, %c0_16] : memref<128x128xbf16, #tpu.memory_space<vmem>>, vector<128x128xbf16>
      tpu.vector_store %arg6[%c0_15, %c0_16], %18 {strides = array<i32>} : memref<128x128xbf16, #tpu.memory_space<vmem>>, vector<128x128xbf16>,
    } else {
    }
    return
  }
  func.func @transform_0(%arg0: i32, %arg1: i32, %arg2: i32) -> (i32, i32) {
    %c0_i32 = arith.constant 0 : i32
    return %arg0, %arg2 : i32, i32
  }
  func.func @transform_1(%arg0: i32, %arg1: i32, %arg2: i32) -> (i32, i32) {
    %c0_i32 = arith.constant 0 : i32
    return %arg2, %arg1 : i32, i32
  }
  func.func @transform_2(%arg0: i32, %arg1: i32, %arg2: i32) -> (i32, i32) {
    %c0_i32 = arith.constant 0 : i32
    %c0_i32_0 = arith.constant 0 : i32
    return %c0_i32, %arg1 : i32, i32
  }
  func.func @transform_3(%arg0: i32, %arg1: i32, %arg2: i32) -> (i32, i32) {
    %c0_i32 = arith.constant 0 : i32
    return %arg0, %arg1 : i32, i32
  }
}

</mosaic_0001>

<llo_original>
// kernel: tpu_custom_call.1
$region0: #{tpu_custom_call.1}
  #allocation0 [shape = 'u32[]', space=smem, size = 0x4, offset = 0x4, fixed_abs, tag = 'smem constant byte address 0x4 - core index']
  #allocation1 [shape = 'u32[144,128]{1,0:T(1,128)}', space=vmem, size = 0x12000, scoped, tag = 'internal scratch']
  #allocation2 [shape = 'f32[128,128]{1,0:T(8,128)}', space=vmem, size = 0x10000, scoped, tag = 'scratch operand']
  %s0 = inlined_call_operand.vmem [shape: bf16[128,36], index: 0, kind: input, shape index: {}]
  %s1 = inlined_call_operand.vmem [shape: bf16[36,128], index: 1, kind: input, shape index: {}]
  %s2 = inlined_call_operand.vmem [shape: f32[1,128], index: 2, kind: input, shape index: {}]
  %s3 = inlined_call_operand.hbm [shape: bf16[128,128], index: 3, kind: output, shape index: {}]
  %s4 = sld [smem:[#allocation0]]
  $region30: #{tpu_custom_call.1} parent=0
    _
  %s6 = ssub.s32 1, %s4
  %s7 = scalar_select 0, %s6, %s4
  $region1: #{tpu_custom_call.1} parent=0
    #allocation3 [shape = 'u8[32768]{0}', space=vmem, size = 0x8000, scoped, tag = 'output window, operand 0, single buffered']
    #allocation4 [shape = 's32[1]{0}', space=sflag, size = 0x4, scoped, tag = 'scoped memory for tpu_custom_call.1']
    %8 = vsyncpa [#allocation4], 0
    // Predicated region
    $region2: #{tpu_custom_call.1} parent=1 // pred_check
      _
    $region3: #{tpu_custom_call.1} parent=1 // pred_check_branch
      %10 = sbr.rel (0) target = $region5
    $region4: #{tpu_custom_call.1} parent=1 // pred_region
      _
    $region5: #{tpu_custom_call.1} parent=1 // pred_fallthru
      _
    // Predicated region
    $region6: #{tpu_custom_call.1} parent=1 // pred_check
      _
    $region7: #{tpu_custom_call.1} parent=1 // pred_check_branch
      %12 = sbr.rel (0) target = $region9
    $region8: #{tpu_custom_call.1} parent=1 // pred_region
      _
    $region9: #{tpu_custom_call.1} parent=1 // pred_fallthru
      _
    // Predicated region
    $region10: #{tpu_custom_call.1} parent=1 // pred_check
      _
    $region11: #{tpu_custom_call.1} parent=1 // pred_check_branch
      %14 = sbr.rel (0) target = $region13
    $region12: #{tpu_custom_call.1} parent=1 // pred_region
      _
    $region13: #{tpu_custom_call.1} parent=1 // pred_fallthru
      _
    %p16 = scmp.eq.s32.totalorder 0, 0
    // Predicated region
    $region14: #{tpu_custom_call.1} parent=1 // pred_check
      %p17 = pneg %p16
    $region15: #{tpu_custom_call.1} parent=1 // pred_check_branch
      %19 = sbr.rel (%p17) target = $region17
    $region16: #{tpu_custom_call.1} parent=1 // pred_region
      %20 = vst [vmem:[#allocation2] sm:$0xff] 0.0
      %21 = vst [vmem:[#allocation2 + $0x8] sm:$0xff] 0.0
      %22 = vst [vmem:[#allocation2 + $0x10] sm:$0xff] 0.0
      %23 = vst [vmem:[#allocation2 + $0x18] sm:$0xff] 0.0
      %24 = vst [vmem:[#allocation2 + $0x20] sm:$0xff] 0.0
      %25 = vst [vmem:[#allocation2 + $0x28] sm:$0xff] 0.0
      %26 = vst [vmem:[#allocation2 + $0x30] sm:$0xff] 0.0
      %27 = vst [vmem:[#allocation2 + $0x38] sm:$0xff] 0.0
      %28 = vst [vmem:[#allocation2 + $0x40] sm:$0xff] 0.0
      %29 = vst [vmem:[#allocation2 + $0x48] sm:$0xff] 0.0
      %30 = vst [vmem:[#allocation2 + $0x50] sm:$0xff] 0.0
      %31 = vst [vmem:[#allocation2 + $0x58] sm:$0xff] 0.0
      %32 = vst [vmem:[#allocation2 + $0x60] sm:$0xff] 0.0
      %33 = vst [vmem:[#allocation2 + $0x68] sm:$0xff] 0.0
      %34 = vst [vmem:[#allocation2 + $0x70] sm:$0xff] 0.0
      %35 = vst [vmem:[#allocation2 + $0x78] sm:$0xff] 0.0
    $region17: #{tpu_custom_call.1} parent=1 // pred_fallthru
      _
    %v36 = vld [vmem:[#allocation2] sm:$0xff]
    %v37 = vld [vmem:[#allocation2 + $0x8] sm:$0xff]
    %v38 = vld [vmem:[#allocation2 + $0x10] sm:$0xff]
    %v39 = vld [vmem:[#allocation2 + $0x18] sm:$0xff]
    %v40 = vld [vmem:[#allocation2 + $0x20] sm:$0xff]
    %v41 = vld [vmem:[#allocation2 + $0x28] sm:$0xff]
    %v42 = vld [vmem:[#allocation2 + $0x30] sm:$0xff]
    %v43 = vld [vmem:[#allocation2 + $0x38] sm:$0xff]
    %v44 = vld [vmem:[#allocation2 + $0x40] sm:$0xff]
    %v45 = vld [vmem:[#allocation2 + $0x48] sm:$0xff]
    %v46 = vld [vmem:[#allocation2 + $0x50] sm:$0xff]
    %v47 = vld [vmem:[#allocation2 + $0x58] sm:$0xff]
    %v48 = vld [vmem:[#allocation2 + $0x60] sm:$0xff]
    %v49 = vld [vmem:[#allocation2 + $0x68] sm:$0xff]
    %v50 = vld [vmem:[#allocation2 + $0x70] sm:$0xff]
    %v51 = vld [vmem:[#allocation2 + $0x78] sm:$0xff]
    %v52 = vld [vmem:[%s0] sm:$0xf]
    %v53 = vld [vmem:[%s0 + $0x4] sm:$0xf]
    %v54 = vld [vmem:[%s0 + $0x8] sm:$0xf]
    %v55 = vld [vmem:[%s0 + $0xc] sm:$0xf]
    %v56 = vld [vmem:[%s0 + $0x10] sm:$0xf]
    %v57 = vld [vmem:[%s0 + $0x14] sm:$0xf]
    %v58 = vld [vmem:[%s0 + $0x18] sm:$0xf]
    %v59 = vld [vmem:[%s0 + $0x1c] sm:$0xf]
    %v60 = vld [vmem:[%s0 + $0x20] sm:$0xf]
    %v61 = vld [vmem:[%s0 + $0x24] sm:$0xf]
    %v62 = vld [vmem:[%s0 + $0x28] sm:$0xf]
    %v63 = vld [vmem:[%s0 + $0x2c] sm:$0xf]
    %v64 = vld [vmem:[%s0 + $0x30] sm:$0xf]
    %v65 = vld [vmem:[%s0 + $0x34] sm:$0xf]
    %v66 = vld [vmem:[%s0 + $0x38] sm:$0xf]
    %v67 = vld [vmem:[%s0 + $0x3c] sm:$0xf]
    %v68 = vld [vmem:[%s1] sm:$0xf]
    %v69 = vld [vmem:[%s1 + $0x4] sm:$0xf]
    %v70 = vld [vmem:[%s1 + $0x8] sm:$0xf]
    %v71 = vld [vmem:[%s1 + $0xc] sm:$0xf]
    %v72 = vld [vmem:[%s1 + $0x10] sm:$0x3]
    %v89 = vunpack.c.l.b16 %v52
    %v90 = vunpack.c.l.b16 %v53
    %v91 = vunpack.c.l.b16 %v54
    %v92 = vunpack.c.l.b16 %v55
    %v93 = vunpack.c.l.b16 %v56
    %v94 = vunpack.c.l.b16 %v57
    %v95 = vunpack.c.l.b16 %v58
    %v96 = vunpack.c.l.b16 %v59
    %v97 = vunpack.c.l.b16 %v60
    %v98 = vunpack.c.l.b16 %v61
    %v99 = vunpack.c.l.b16 %v62
    %v100 = vunpack.c.l.b16 %v63
    %v101 = vunpack.c.l.b16 %v64
    %v102 = vunpack.c.l.b16 %v65
    %v103 = vunpack.c.l.b16 %v66
    %v104 = vunpack.c.l.b16 %v67
    %v105 = vpack.c.b16 %v90, %v89
    %v106 = vpack.c.b16 %v92, %v91
    %v107 = vpack.c.b16 %v94, %v93
    %v108 = vpack.c.b16 %v96, %v95
    %v109 = vpack.c.b16 %v98, %v97
    %v110 = vpack.c.b16 %v100, %v99
    %v111 = vpack.c.b16 %v102, %v101
    %v112 = vpack.c.b16 %v104, %v103
    %v118 = vunpack.c.l.b16 %v68
    %v119 = vunpack.c.l.b16 %v69
    %v120 = vunpack.c.l.b16 %v70
    %v121 = vunpack.c.l.b16 %v71
    %v122 = vunpack.c.l.b16 %v72
    %v123 = vpack.c.b16 %v119, %v118
    %v124 = vpack.c.b16 %v121, %v120
    %v125 = vpack.c.b16 %v122, %v122
    %vm128 = vcmask 293888
    %v130 = vsel %vm128, %v105, 0
    %v133 = vsel %vm128, %v106, 0
    %v136 = vsel %vm128, %v107, 0
    %v139 = vsel %vm128, %v108, 0
    %v142 = vsel %vm128, %v109, 0
    %v145 = vsel %vm128, %v110, 0
    %v148 = vsel %vm128, %v111, 0
    %v151 = vsel %vm128, %v112, 0
    %vm153 = vcmask 1041408
    %v155 = vsel %vm153, %v125, 0
    %157 = vmatprep.subr.bf16.mxu0 0
    %158 = vmatpush1.bf16.msra.mxu0 %v123
    %159 = vmatprep.subr.bf16.mxu0 0
    %160 = vmatpush1.bf16.msra.mxu0 %v124
    %161 = vmatprep.subr.bf16.mxu0 0
    %162 = vmatpush1.bf16.msra.mxu0 %v155
    %163 = vmatprep.subr.bf16.mxu0 0
    %164 = vmatpush1.bf16.msra.mxu0 0
    %165 = vmatprep.subr.bf16.mxu0 0
    %166 = vmatpush1.bf16.msra.mxu0 0
    %167 = vmatprep.subr.bf16.mxu0 0
    %168 = vmatpush1.bf16.msra.mxu0 0
    %169 = vmatprep.subr.bf16.mxu0 0
    %170 = vmatpush1.bf16.msra.mxu0 0
    %171 = vmatprep.subr.bf16.mxu0 0
    %172 = vmatpush1.bf16.msra.mxu0 0
    %173 = vmatprep.subr.bf16.mxu0 0
    %174 = vmatpush1.bf16.msra.mxu0 0
    %175 = vmatprep.subr.bf16.mxu0 0
    %176 = vmatpush1.bf16.msra.mxu0 0
    %177 = vmatprep.subr.bf16.mxu0 0
    %178 = vmatpush1.bf16.msra.mxu0 0
    %179 = vmatprep.subr.bf16.mxu0 0
    %180 = vmatpush1.bf16.msra.mxu0 0
    %181 = vmatprep.subr.bf16.mxu0 0
    %182 = vmatpush1.bf16.msra.mxu0 0
    %183 = vmatprep.subr.bf16.mxu0 0
    %184 = vmatpush1.bf16.msra.mxu0 0
    %185 = vmatprep.subr.bf16.mxu0 0
    %186 = vmatpush1.bf16.msra.mxu0 0
    %187 = vmatprep.subr.bf16.mxu0 0
    %188 = vmatpush1.bf16.msra.mxu0 0
    %189 = vmatprep.mubr.bf16.mxu0 0
    %190 = vmatmul.mubr.bf16.gmra.mrb[0].mxu0 %v130
    %v191 = vpop.f32.mrb[0].mxu0
    %v192 = vadd.f32 0.0, %v191
    %v193 = vpop.f32.mrb[0].mxu0
    %v194 = vpop.f32.mrb[0].mxu0
    %v195 = vadd.f32 0.0, %v194
    %v196 = vpop.f32.mrb[0].mxu0
    %197 = vmatprep.mubr.bf16.mxu0 0
    %198 = vmatmul.mubr.bf16.gmra.mrb[0].mxu0 %v133
    %v199 = vpop.f32.mrb[0].mxu0
    %v200 = vadd.f32 0.0, %v199
    %v201 = vpop.f32.mrb[0].mxu0
    %v202 = vpop.f32.mrb[0].mxu0
    %v203 = vadd.f32 0.0, %v202
    %v204 = vpop.f32.mrb[0].mxu0
    %205 = vmatprep.mubr.bf16.mxu0 0
    %206 = vmatmul.mubr.bf16.gmra.mrb[0].mxu0 %v136
    %v207 = vpop.f32.mrb[0].mxu0
    %v208 = vadd.f32 0.0, %v207
    %v209 = vpop.f32.mrb[0].mxu0
    %v210 = vpop.f32.mrb[0].mxu0
    %v211 = vadd.f32 0.0, %v210
    %v212 = vpop.f32.mrb[0].mxu0
    %213 = vmatprep.mubr.bf16.mxu0 0
    %214 = vmatmul.mubr.bf16.gmra.mrb[0].mxu0 %v139
    %v215 = vpop.f32.mrb[0].mxu0
    %v216 = vadd.f32 0.0, %v215
    %v217 = vpop.f32.mrb[0].mxu0
    %v218 = vpop.f32.mrb[0].mxu0
    %v219 = vadd.f32 0.0, %v218
    %v220 = vpop.f32.mrb[0].mxu0
    %221 = vmatprep.mubr.bf16.mxu0 0
    %222 = vmatmul.mubr.bf16.gmra.mrb[0].mxu0 %v142
    %v223 = vpop.f32.mrb[0].mxu0
    %v224 = vadd.f32 0.0, %v223
    %v225 = vpop.f32.mrb[0].mxu0
    %v226 = vpop.f32.mrb[0].mxu0
    %v227 = vadd.f32 0.0, %v226
    %v228 = vpop.f32.mrb[0].mxu0
    %229 = vmatprep.mubr.bf16.mxu0 0
    %230 = vmatmul.mubr.bf16.gmra.mrb[0].mxu0 %v145
    %v231 = vpop.f32.mrb[0].mxu0
    %v232 = vadd.f32 0.0, %v231
    %v233 = vpop.f32.mrb[0].mxu0
    %v234 = vpop.f32.mrb[0].mxu0
    %v235 = vadd.f32 0.0, %v234
    %v236 = vpop.f32.mrb[0].mxu0
    %237 = vmatprep.mubr.bf16.mxu0 0
    %238 = vmatmul.mubr.bf16.gmra.mrb[0].mxu0 %v148
    %v239 = vpop.f32.mrb[0].mxu0
    %v240 = vadd.f32 0.0, %v239
    %v241 = vpop.f32.mrb[0].mxu0
    %v242 = vpop.f32.mrb[0].mxu0
    %v243 = vadd.f32 0.0, %v242
    %v244 = vpop.f32.mrb[0].mxu0
    %245 = vmatprep.mubr.bf16.mxu0 0
    %246 = vmatmul.mubr.bf16.gmra.mrb[0].mxu0 %v151
    %v247 = vpop.f32.mrb[0].mxu0
    %v248 = vadd.f32 0.0, %v247
    %v249 = vpop.f32.mrb[0].mxu0
    %v250 = vpop.f32.mrb[0].mxu0
    %v251 = vadd.f32 0.0, %v250
    %v252 = vpop.f32.mrb[0].mxu0
    %253 = vdwg.mxu0
    %v254 = vadd.f32 %v36, %v192
    %v255 = vadd.f32 %v37, %v195
    %v256 = vadd.f32 %v38, %v200
    %v257 = vadd.f32 %v39, %v203
    %v258 = vadd.f32 %v40, %v208
    %v259 = vadd.f32 %v41, %v211
    %v260 = vadd.f32 %v42, %v216
    %v261 = vadd.f32 %v43, %v219
    %v262 = vadd.f32 %v44, %v224
    %v263 = vadd.f32 %v45, %v227
    %v264 = vadd.f32 %v46, %v232
    %v265 = vadd.f32 %v47, %v235
    %v266 = vadd.f32 %v48, %v240
    %v267 = vadd.f32 %v49, %v243
    %v268 = vadd.f32 %v50, %v248
    %v269 = vadd.f32 %v51, %v251
    %270 = vst [vmem:[#allocation2] sm:$0xff] %v254
    %271 = vst [vmem:[#allocation2 + $0x8] sm:$0xff] %v255
    %272 = vst [vmem:[#allocation2 + $0x10] sm:$0xff] %v256
    %273 = vst [vmem:[#allocation2 + $0x18] sm:$0xff] %v257
    %274 = vst [vmem:[#allocation2 + $0x20] sm:$0xff] %v258
    %275 = vst [vmem:[#allocation2 + $0x28] sm:$0xff] %v259
    %276 = vst [vmem:[#allocation2 + $0x30] sm:$0xff] %v260
    %277 = vst [vmem:[#allocation2 + $0x38] sm:$0xff] %v261
    %278 = vst [vmem:[#allocation2 + $0x40] sm:$0xff] %v262
    %279 = vst [vmem:[#allocation2 + $0x48] sm:$0xff] %v263
    %280 = vst [vmem:[#allocation2 + $0x50] sm:$0xff] %v264
    %281 = vst [vmem:[#allocation2 + $0x58] sm:$0xff] %v265
    %282 = vst [vmem:[#allocation2 + $0x60] sm:$0xff] %v266
    %283 = vst [vmem:[#allocation2 + $0x68] sm:$0xff] %v267
    %284 = vst [vmem:[#allocation2 + $0x70] sm:$0xff] %v268
    %285 = vst [vmem:[#allocation2 + $0x78] sm:$0xff] %v269
    // Predicated region
    $region18: #{tpu_custom_call.1} parent=1 // pred_check
      %p286 = pneg %p16
    $region19: #{tpu_custom_call.1} parent=1 // pred_check_branch
      %288 = sbr.rel (%p286) target = $region21
    $region20: #{tpu_custom_call.1} parent=1 // pred_region
      %v289 = vld [vmem:[#allocation2] sm:$0xff]
      %v290 = vld [vmem:[#allocation2 + $0x8] sm:$0xff]
      %v291 = vld [vmem:[#allocation2 + $0x10] sm:$0xff]
      %v292 = vld [vmem:[#allocation2 + $0x18] sm:$0xff]
      %v293 = vld [vmem:[#allocation2 + $0x20] sm:$0xff]
      %v294 = vld [vmem:[#allocation2 + $0x28] sm:$0xff]
      %v295 = vld [vmem:[#allocation2 + $0x30] sm:$0xff]
      %v296 = vld [vmem:[#allocation2 + $0x38] sm:$0xff]
      %v297 = vld [vmem:[#allocation2 + $0x40] sm:$0xff]
      %v298 = vld [vmem:[#allocation2 + $0x48] sm:$0xff]
      %v299 = vld [vmem:[#allocation2 + $0x50] sm:$0xff]
      %v300 = vld [vmem:[#allocation2 + $0x58] sm:$0xff]
      %v301 = vld [vmem:[#allocation2 + $0x60] sm:$0xff]
      %v302 = vld [vmem:[#allocation2 + $0x68] sm:$0xff]
      %v303 = vld [vmem:[#allocation2 + $0x70] sm:$0xff]
      %v304 = vld [vmem:[#allocation2 + $0x78] sm:$0xff]
      %v305 = vld [vmem:[%s2] sm:$0x1]
      %v307 = vlaneseq
      %v308 = vshrl.u32 %v307, 7
      %v309 = vsub.s32 0, %v308
      %v310 = vrot.slane %v305, %v309
      %v312 = vadd.f32 %v289, %v310
      %v313 = vadd.f32 %v290, %v310
      %v314 = vadd.f32 %v291, %v310
      %v315 = vadd.f32 %v292, %v310
      %v316 = vadd.f32 %v293, %v310
      %v317 = vadd.f32 %v294, %v310
      %v318 = vadd.f32 %v295, %v310
      %v319 = vadd.f32 %v296, %v310
      %v320 = vadd.f32 %v297, %v310
      %v321 = vadd.f32 %v298, %v310
      %v322 = vadd.f32 %v299, %v310
      %v323 = vadd.f32 %v300, %v310
      %v324 = vadd.f32 %v301, %v310
      %v325 = vadd.f32 %v302, %v310
      %v326 = vadd.f32 %v303, %v310
      %v327 = vadd.f32 %v304, %v310
      %v328 = vmax.f32 %v312, 0.0
      %v329 = vmax.f32 %v313, 0.0
      %v330 = vmax.f32 %v314, 0.0
      %v331 = vmax.f32 %v315, 0.0
      %v332 = vmax.f32 %v316, 0.0
      %v333 = vmax.f32 %v317, 0.0
      %v334 = vmax.f32 %v318, 0.0
      %v335 = vmax.f32 %v319, 0.0
      %v336 = vmax.f32 %v320, 0.0
      %v337 = vmax.f32 %v321, 0.0
      %v338 = vmax.f32 %v322, 0.0
      %v339 = vmax.f32 %v323, 0.0
      %v340 = vmax.f32 %v324, 0.0
      %v341 = vmax.f32 %v325, 0.0
      %v342 = vmax.f32 %v326, 0.0
      %v343 = vmax.f32 %v327, 0.0
      %v344 = vpack.c.bf16 %v329, %v328
      %v345 = vpack.c.bf16 %v331, %v330
      %v346 = vpack.c.bf16 %v333, %v332
      %v347 = vpack.c.bf16 %v335, %v334
      %v348 = vpack.c.bf16 %v337, %v336
      %v349 = vpack.c.bf16 %v339, %v338
      %v350 = vpack.c.bf16 %v341, %v340
      %v351 = vpack.c.bf16 %v343, %v342
      %v360 = vunpack.c.l.b16 %v344
      %v361 = vunpack.c.h.b16 %v344
      %v362 = vunpack.c.l.b16 %v345
      %v363 = vunpack.c.h.b16 %v345
      %v364 = vunpack.c.l.b16 %v346
      %v365 = vunpack.c.h.b16 %v346
      %v366 = vunpack.c.l.b16 %v347
      %v367 = vunpack.c.h.b16 %v347
      %v368 = vunpack.c.l.b16 %v348
      %v369 = vunpack.c.h.b16 %v348
      %v370 = vunpack.c.l.b16 %v349
      %v371 = vunpack.c.h.b16 %v349
      %v372 = vunpack.c.l.b16 %v350
      %v373 = vunpack.c.h.b16 %v350
      %v374 = vunpack.c.l.b16 %v351
      %v375 = vunpack.c.h.b16 %v351
      %v376 = vpack.c.b16 %v360, %v360
      %v377 = vpack.c.b16 %v361, %v361
      %v378 = vpack.c.b16 %v362, %v362
      %v379 = vpack.c.b16 %v363, %v363
      %v380 = vpack.c.b16 %v364, %v364
      %v381 = vpack.c.b16 %v365, %v365
      %v382 = vpack.c.b16 %v366, %v366
      %v383 = vpack.c.b16 %v367, %v367
      %v384 = vpack.c.b16 %v368, %v368
      %v385 = vpack.c.b16 %v369, %v369
      %v386 = vpack.c.b16 %v370, %v370
      %v387 = vpack.c.b16 %v371, %v371
      %v388 = vpack.c.b16 %v372, %v372
      %v389 = vpack.c.b16 %v373, %v373
      %v390 = vpack.c.b16 %v374, %v374
      %v391 = vpack.c.b16 %v375, %v375
      %408 = vst [vmem:[#allocation3] sm:$0xf] %v376
      %409 = vst [vmem:[#allocation3 + $0x4] sm:$0xf] %v377
      %410 = vst [vmem:[#allocation3 + $0x8] sm:$0xf] %v378
      %411 = vst [vmem:[#allocation3 + $0xc] sm:$0xf] %v379
      %412 = vst [vmem:[#allocation3 + $0x10] sm:$0xf] %v380
      %413 = vst [vmem:[#allocation3 + $0x14] sm:$0xf] %v381
      %414 = vst [vmem:[#allocation3 + $0x18] sm:$0xf] %v382
      %415 = vst [vmem:[#allocation3 + $0x1c] sm:$0xf] %v383
      %416 = vst [vmem:[#allocation3 + $0x20] sm:$0xf] %v384
      %417 = vst [vmem:[#allocation3 + $0x24] sm:$0xf] %v385
      %418 = vst [vmem:[#allocation3 + $0x28] sm:$0xf] %v386
      %419 = vst [vmem:[#allocation3 + $0x2c] sm:$0xf] %v387
      %420 = vst [vmem:[#allocation3 + $0x30] sm:$0xf] %v388
      %421 = vst [vmem:[#allocation3 + $0x34] sm:$0xf] %v389
      %422 = vst [vmem:[#allocation3 + $0x38] sm:$0xf] %v390
      %423 = vst [vmem:[#allocation3 + $0x3c] sm:$0xf] %v391
    $region21: #{tpu_custom_call.1} parent=1 // pred_fallthru
      _
    // Predicated region
    $region22: #{tpu_custom_call.1} parent=1 // pred_check
      _
    $region23: #{tpu_custom_call.1} parent=1 // pred_check_branch
      %425 = sbr.rel (0) target = $region25
    $region24: #{tpu_custom_call.1} parent=1 // pred_region
      %s427 = ssub.s32 1024, 1024
      %428 = vsyncadd [#allocation4], %s427
      %s429 = sshll.u32 [#allocation3], 4
      %s430 = int_to_ptr.vmem [resolvable:$true] %s429
      %435 = dma.vmem_to_hbm [thread:$0]  %s430, 1024, %s3, [#allocation4], 64, 64, 4
    $region25: #{tpu_custom_call.1} parent=1 // pred_fallthru
      _
    // Predicated region
    $region26: #{tpu_custom_call.1} parent=1 // pred_check
      _
    $region27: #{tpu_custom_call.1} parent=1 // pred_check_branch
      %437 = sbr.rel (0) target = $region29
    $region28: #{tpu_custom_call.1} parent=1 // pred_region
      %438 = dma.done [#allocation4], 1024
    $region29: #{tpu_custom_call.1} parent=1 // pred_fallthru
      _
    %439 = vsyncpa [#allocation4], 1

</llo_original>
